<compile_context>
chip_gen: v7x
topology: tpu7x:2x2x1
jax: 0.10.0
libtpu: 0.0.40
codegen_flags: <defaults>
</compile_context>

<pallas_src>
import jax
import jax.numpy as jnp
from jax.experimental import pallas as pl
from jax.experimental.pallas import tpu as pltpu

IN_CHANNELS = 4
OUT_CHANNELS = 32
FILTER_SIZE = 2           # K (diffusion / Chebyshev order)
D_D = 7                   # d_d in the PyTorch script
N_NODES = 16
N_EDGES = 48
BATCH = 2                 # independent sequences (parallel grid axis)
SEQ_LEN = 8               # recurrent steps folded into one kernel (arbitrary grid axis)


# ----------------------------------------------------------------------------
# Pallas kernel: one DCRNN cell step (+ ReLU + Linear) at grid point (b, t).
#   x_ref  : [1, 1, N, Cin]     per-step node features (streamed)
#   h0_ref : [1, N, Cout]       initial hidden state for this batch element
#   p2_ref : [2N, N]            [P_out ; P_in] stacked on sublanes (resident)
#   w_ref  : [S*C, 3*Cout]      fused gate weights, columns [Z | R | H]; row blocks
#                               [k=0 (out+in pre-summed), k=1 out, k=1 in, ...]
#   b_ref  : [1, 3*Cout + d_d]  [bz | br | bh | b_linear]
#   wl_ref : [Cout, d_d]        Linear weight (transposed)
#   out_ref: [1, 1, N, 64]      lane-fused output slab [h_new | y | zero pad]
#   h_state: VMEM [N, Cout]     hidden state carried across the time axis
# ----------------------------------------------------------------------------
def _t_dcrnn_cell_kernel(x_ref, h0_ref, p2_ref, w_ref, b_ref, wl_ref,
                         out_ref, h_state):
    t = pl.program_id(1)
    N, cin = x_ref.shape[2], x_ref.shape[3]
    cout = h0_ref.shape[-1]
    d_d = wl_ref.shape[-1]
    C = cin + cout
    K = (w_ref.shape[0] // C + 1) // 2        # row blocks S = 1 + 2*(K-1)

    @pl.when(t == 0)
    def _():
        h_state[...] = h0_ref[0]

    X = x_ref[0, 0]                            # [N, Cin]
    H = h_state[...]                           # [N, Cout]
    P2 = p2_ref[...]                           # [2N, N]
    W = w_ref[...]                             # [S*C, 3*Cout]
    B = b_ref[...]                             # [1, 3*Cout + d_d]

    # ---- Z and R gates: one propagation dot + one fused wide contraction ----
    XH = jnp.concatenate([X, H], axis=1)       # [N, C]
    zr_pieces = [XH]
    x_prop = []                                # X-columns of propagated terms (reused below)
    if K > 1:
        PXH = jnp.dot(P2, XH, preferred_element_type=jnp.float32)       # [2N, C]
        T1o, T1i = PXH[:N], PXH[N:]
        zr_pieces += [T1o, T1i]
        x_prop += [T1o[:, :cin], T1i[:, :cin]]
        T0o = T0i = XH
        for _ in range(2, K):
            # TODO(synk): re-verify the K>2 Chebyshev recursion against
            # torch_geometric_temporal's DConv (dead code at K == 2).
            T2o = 2.0 * jnp.dot(P2[:N], T1o, preferred_element_type=jnp.float32) - T0o
            T2i = 2.0 * jnp.dot(P2[N:], T1i, preferred_element_type=jnp.float32) - T0i
            zr_pieces += [T2o, T2i]
            x_prop += [T2o[:, :cin], T2i[:, :cin]]
            T0o, T1o = T1o, T2o
            T0i, T1i = T1i, T2i
    F_zr = jnp.concatenate(zr_pieces, axis=1)  # [N, S*C]

    ZR = jax.nn.sigmoid(
        jnp.dot(F_zr, W[:, :2 * cout], preferred_element_type=jnp.float32)
        + B[:, :2 * cout])
    Z = ZR[:, :cout]
    R = ZR[:, cout:]

    # ---- candidate gate: reuse the cached X-propagation, only propagate H*R ----
    HR = H * R
    h_pieces = [X, HR]
    if K > 1:
        PHR = jnp.dot(P2, HR, preferred_element_type=jnp.float32)       # [2N, Cout]
        S1o, S1i = PHR[:N], PHR[N:]
        h_pieces += [x_prop[0], S1o, x_prop[1], S1i]
        S0o = S0i = HR
        xi = 2
        for _ in range(2, K):
            S2o = 2.0 * jnp.dot(P2[:N], S1o, preferred_element_type=jnp.float32) - S0o
            S2i = 2.0 * jnp.dot(P2[N:], S1i, preferred_element_type=jnp.float32) - S0i
            h_pieces += [x_prop[xi], S2o, x_prop[xi + 1], S2i]
            xi += 2
            S0o, S1o = S1o, S2o
            S0i, S1i = S1i, S2i
    F_h = jnp.concatenate(h_pieces, axis=1)    # [N, S*C]

    H_tilde = jnp.tanh(
        jnp.dot(F_h, W[:, 2 * cout:], preferred_element_type=jnp.float32)
        + B[:, 2 * cout:3 * cout])

    H_new = Z * H + (1.0 - Z) * H_tilde
    h_state[...] = H_new                       # carried to step t+1

    # ---- y = Linear(ReLU(h_new)); single lane-fused [N, 64] store ----
    Y = jnp.dot(jnp.maximum(H_new, 0.0), wl_ref[...],
                preferred_element_type=jnp.float32) + B[:, 3 * cout:]
    pad = out_ref.shape[-1] - cout - d_d
    out_ref[0, 0] = jnp.concatenate(
        [H_new, Y, jnp.zeros((N, pad), jnp.float32)], axis=1)


# ----------------------------------------------------------------------------
# One-time packing (hoisted off the per-step hot path)
# ----------------------------------------------------------------------------
def build_propagation_matrices(edge_index, edge_weight, n_nodes):
    """Dense out-/in-degree-normalized propagation matrices (matches
    torch_geometric_temporal DConv). Zero-degree nodes are guarded to 0."""
    row, col = edge_index[0], edge_index[1]
    adj = jnp.zeros((n_nodes, n_nodes), jnp.float32).at[row, col].add(edge_weight)
    deg_out = adj.sum(axis=1)
    deg_in = adj.sum(axis=0)
    inv_out = jnp.where(deg_out > 0, 1.0 / deg_out, 0.0)
    inv_in = jnp.where(deg_in > 0, 1.0 / deg_in, 0.0)
    norm_out = inv_out[row]
    norm_in = inv_in[row]
    P_out = jnp.zeros((n_nodes, n_nodes), jnp.float32).at[col, row].add(norm_out)
    P_in = jnp.zeros((n_nodes, n_nodes), jnp.float32).at[col, row].add(norm_in)
    return P_out, P_in


def _pack_gate_weights(W):
    # W: [2, K, C, cout]  ->  [(1 + 2*(K-1)) * C, cout]
    # k = 0: both diffusion directions see the raw [X|H] input, so pre-sum them.
    K = W.shape[1]
    blocks = [W[0, 0] + W[1, 0]]
    for k in range(1, K):
        blocks += [W[0, k], W[1, k]]
    return jnp.concatenate(blocks, axis=0)


def pack_params(params):
    """Pack gate/linear weights once per parameter set (not per step)."""
    w_all = jnp.concatenate([_pack_gate_weights(params["Wz"]),
                             _pack_gate_weights(params["Wr"]),
                             _pack_gate_weights(params["Wh"])], axis=1)  # [S*C, 3*cout]
    b_all = jnp.concatenate([params["bz"], params["br"], params["bh"],
                             params["bl"]]).reshape(1, -1)               # [1, 3*cout+d_d]
    wl = params["Wl"].T                                                  # [cout, d_d]
    return w_all, b_all, wl


def init_params(key, cin, cout, K, d_d):
    C = cin + cout
    ks = jax.random.split(key, 5)

    def glorot(k, shape):
        fan_in, fan_out = shape[-2], shape[-1]
        limit = (6.0 / (fan_in + fan_out)) ** 0.5
        return jax.random.uniform(k, shape, jnp.float32, -limit, limit)

    return {
        "Wz": glorot(ks[0], (2, K, C, cout)), "bz": jnp.zeros((cout,), jnp.float32),
        "Wr": glorot(ks[1], (2, K, C, cout)), "br": jnp.zeros((cout,), jnp.float32),
        "Wh": glorot(ks[2], (2, K, C, cout)), "bh": jnp.zeros((cout,), jnp.float32),
        # torch Linear: weight [d_d, cout], bias [d_d]
        "Wl": glorot(ks[3], (d_d, cout)),
        "bl": jax.random.uniform(ks[4], (d_d,), jnp.float32, -0.1, 0.1),
    }


# ----------------------------------------------------------------------------
# Rollout: B independent sequences x T recurrent steps in ONE pallas_call.
# ----------------------------------------------------------------------------
@jax.jit
def t_dcrnn_rollout(x_seq, h0, p2, w_all, b_all, wl):
    """x_seq: [B,T,N,Cin], h0: [B,N,Cout]; p2/w_all/b_all/wl are pre-packed.
    Returns per-step module outputs (h_seq [B,T,N,Cout], y_seq [B,T,N,d_d])."""
    Bsz, T, N, cin = x_seq.shape
    cout = h0.shape[-1]
    d_d = wl.shape[-1]
    SC = w_all.shape[0]
    out_lanes = 64                        # cout + d_d = 39 -> one lane-dense output slab
    assert cout + d_d <= out_lanes

    out = pl.pallas_call(
        _t_dcrnn_cell_kernel,
        out_shape=jax.ShapeDtypeStruct((Bsz, T, N, out_lanes), jnp.float32),
        grid=(Bsz, T),
        in_specs=[
            pl.BlockSpec((1, 1, N, cin), lambda b, t: (b, t, 0, 0)),     # streamed x
            pl.BlockSpec((1, N, cout), lambda b, t: (b, 0, 0)),          # h0 per batch
            pl.BlockSpec((2 * N, N), lambda b, t: (0, 0)),               # resident P
            pl.BlockSpec((SC, 3 * cout), lambda b, t: (0, 0)),           # resident W
            pl.BlockSpec((1, 3 * cout + d_d), lambda b, t: (0, 0)),      # resident bias
            pl.BlockSpec((cout, d_d), lambda b, t: (0, 0)),              # resident Wl
        ],
        out_specs=pl.BlockSpec((1, 1, N, out_lanes), lambda b, t: (b, t, 0, 0)),
        scratch_shapes=[pltpu.VMEM((N, cout), jnp.float32)],             # carried H
        compiler_params=pltpu.CompilerParams(
            dimension_semantics=("parallel", "arbitrary")),
    )(x_seq, h0, p2, w_all, b_all, wl)

    return out[..., :cout], out[..., cout:cout + d_d]


def t_dcrnn_forward(x, edge_index, edge_weight, h0, params):
    """Single-step forward matching T_DCRNN.forward (a B=1, T=1 rollout).
    For hot loops, hoist build_propagation_matrices()/pack_params() and call
    t_dcrnn_rollout with the full sequence instead."""
    P_out, P_in = build_propagation_matrices(edge_index, edge_weight, x.shape[0])
    p2 = jnp.concatenate([P_out, P_in], axis=0)
    w_all, b_all, wl = pack_params(params)
    h_seq, y_seq = t_dcrnn_rollout(x[None, None], h0[None], p2, w_all, b_all, wl)
    # h0.detach() in torch == just the value in JAX
    return h_seq[0, 0], y_seq[0, 0]


# ----------------------------------------------------------------------------
# Pure-JAX reference (mirrors the PyTorch module step), run at f32 'highest'.
# ----------------------------------------------------------------------------
def t_dcrnn_reference_step(x, P_out, P_in, h, params):
    def dconv(XH, W, b):
        K = W.shape[1]
        acc = XH @ W[0, 0] + XH @ W[1, 0]
        if K > 1:
            T1o = P_out @ XH
            T1i = P_in @ XH
            acc = acc + T1o @ W[0, 1] + T1i @ W[1, 1]
            T0o = T0i = XH
            for k in range(2, K):
                T2o = 2.0 * (P_out @ T1o) - T0o
                T2i = 2.0 * (P_in @ T1i) - T0i
                acc = acc + T2o @ W[0, k] + T2i @ W[1, k]
                T0o, T1o = T1o, T2o
                T0i, T1i = T1i, T2i
        return acc + b

    XH = jnp.concatenate([x, h], axis=-1)
    Z = jax.nn.sigmoid(dconv(XH, params["Wz"], params["bz"]))
    R = jax.nn.sigmoid(dconv(XH, params["Wr"], params["br"]))
    H_tilde = jnp.tanh(dconv(jnp.concatenate([x, h * R], axis=-1),
                             params["Wh"], params["bh"]))
    Hn = Z * h + (1.0 - Z) * H_tilde
    Y = jnp.maximum(Hn, 0.0) @ params["Wl"].T + params["bl"]
    return Hn, Y


if __name__ == "__main__":
    key = jax.random.PRNGKey(0)
    k1, k2, k3, k4, k5 = jax.random.split(key, 5)

    # Deterministic small graph: a ring (every node has in/out degree >= 1) plus
    # random extra edges.  Duplicate edges sum their weights (as to_dense_adj does).
    ring_src = jnp.arange(N_NODES, dtype=jnp.int32)
    ring_dst = (ring_src + 1) % N_NODES
    n_extra = N_EDGES - N_NODES
    extra_src = jax.random.randint(k1, (n_extra,), 0, N_NODES, dtype=jnp.int32)
    extra_dst = jax.random.randint(k2, (n_extra,), 0, N_NODES, dtype=jnp.int32)
    edge_index = jnp.stack([jnp.concatenate([ring_src, extra_src]),
                            jnp.concatenate([ring_dst, extra_dst])])
    edge_weight = jax.random.uniform(k3, (N_EDGES,), jnp.float32, 0.1, 1.0)

    x_seq = jax.random.normal(k4, (BATCH, SEQ_LEN, N_NODES, IN_CHANNELS), jnp.float32)
    h0 = jax.random.normal(k5, (BATCH, N_NODES, OUT_CHANNELS), jnp.float32)
    params = init_params(jax.random.PRNGKey(42), IN_CHANNELS, OUT_CHANNELS,
                         FILTER_SIZE, D_D)

    # --- one-time graph / weight packing (hoisted off the per-step hot path) ---
    P_out, P_in = build_propagation_matrices(edge_index, edge_weight, N_NODES)
    p2 = jnp.concatenate([P_out, P_in], axis=0)                          # [2N, N]
    w_all, b_all, wl = pack_params(params)

    # --- Pallas rollout: B x T cell steps in one kernel launch ---
    h_seq, y_seq = t_dcrnn_rollout(x_seq, h0, p2, w_all, b_all, wl)
    jax.block_until_ready((h_seq, y_seq))

    # --- reference: apply the module's single-step forward T times (f32 highest) ---
    with jax.default_matmul_precision("highest"):
        h_ref_steps, y_ref_steps = [], []
        h = h0
        for t in range(SEQ_LEN):
            h, y = t_dcrnn_reference_step(x_seq[:, t], P_out, P_in, h, params)
            h_ref_steps.append(h)
            y_ref_steps.append(y)
        h_ref = jnp.stack(h_ref_steps, axis=1)
        y_ref = jnp.stack(y_ref_steps, axis=1)

    assert h_seq.shape == (BATCH, SEQ_LEN, N_NODES, OUT_CHANNELS)
    assert y_seq.shape == (BATCH, SEQ_LEN, N_NODES, D_D)

    err_h = float(jnp.max(jnp.abs(h_seq - h_ref)))
    err_y = float(jnp.max(jnp.abs(y_seq - y_ref)))
    # Kernel matmuls run at default MXU precision (bf16 operands, f32 accumulate);
    # tolerance covers bf16 rounding accumulated over SEQ_LEN recurrent steps vs
    # the float32 ('highest' precision) reference.  Real bugs give O(0.3+) errors.
    assert err_h < 6e-2, f"h mismatch: max abs err = {err_h}"
    assert err_y < 6e-2, f"y mismatch: max abs err = {err_y}"

    print("KERNEL_OK")
</pallas_src>

<mosaic_0001>
module attributes {stable_mosaic.version = 11 : i64} {
  func.func @_t_dcrnn_cell_kernel(%arg0: i32, %arg1: i32, %arg2: memref<1x1x16x4xf32, #tpu.memory_space<vmem>>, %arg3: memref<1x16x32xf32, #tpu.memory_space<vmem>>, %arg4: memref<32x16xf32, #tpu.memory_space<vmem>>, %arg5: memref<108x96xf32, #tpu.memory_space<vmem>>, %arg6: memref<1x103xf32, #tpu.memory_space<vmem>>, %arg7: memref<32x7xf32, #tpu.memory_space<vmem>>, %arg8: memref<1x1x16x64xf32, #tpu.memory_space<vmem>>, %arg9: memref<16x32xf32, #tpu.memory_space<vmem>>) attributes {dimension_semantics = [#tpu.dimension_semantics<parallel>, #tpu.dimension_semantics<arbitrary>], iteration_bounds = array<i64: 2, 8>, scalar_prefetch = 0 : i64, scratch_operands = 1 : i64, tpu.core_type = #tpu.core_type<tc>, window_params = [{transform_indices = @transform_0, window_bounds = array<i64: 1, 1, 16, 4>}, {transform_indices = @transform_1, window_bounds = array<i64: 1, 16, 32>}, {pipeline_mode = #tpu.pipeline_mode<synchronous>, transform_indices = @transform_2, window_bounds = array<i64: 32, 16>}, {pipeline_mode = #tpu.pipeline_mode<synchronous>, transform_indices = @transform_3, window_bounds = array<i64: 108, 96>}, {pipeline_mode = #tpu.pipeline_mode<synchronous>, transform_indices = @transform_4, window_bounds = array<i64: 1, 103>}, {pipeline_mode = #tpu.pipeline_mode<synchronous>, transform_indices = @transform_5, window_bounds = array<i64: 32, 7>}, {transform_indices = @transform_6, window_bounds = array<i64: 1, 1, 16, 64>}]} {
    %c0_i32 = arith.constant 0 : i32
    %0 = arith.cmpi eq, %arg1, %c0_i32 : i32
    %1 = arith.extui %0 : i1 to i32
    %c0_i32_0 = arith.constant 0 : i32
    %2 = arith.cmpi ne, %1, %c0_i32_0 : i32
    scf.if %2 {
      %c0_28 = arith.constant 0 : index
      %c0_29 = arith.constant 0 : index
      %c0_30 = arith.constant 0 : index
      %57 = vector.load %arg3[%c0_28, %c0_29, %c0_30] : memref<1x16x32xf32, #tpu.memory_space<vmem>>, vector<1x16x32xf32>
      %58 = vector.shape_cast %57 : vector<1x16x32xf32> to vector<16x32xf32>
      %c0_31 = arith.constant 0 : index
      %c0_32 = arith.constant 0 : index
      %59 = vector.load %arg9[%c0_31, %c0_32] : memref<16x32xf32, #tpu.memory_space<vmem>>, vector<16x32xf32>
      tpu.vector_store %arg9[%c0_31, %c0_32], %58 {strides = array<i32>} : memref<16x32xf32, #tpu.memory_space<vmem>>, vector<16x32xf32>,
    } else {
    }
    %c0 = arith.constant 0 : index
    %c0_1 = arith.constant 0 : index
    %c0_2 = arith.constant 0 : index
    %c0_3 = arith.constant 0 : index
    %3 = vector.load %arg2[%c0, %c0_1, %c0_2, %c0_3] : memref<1x1x16x4xf32, #tpu.memory_space<vmem>>, vector<1x1x16x4xf32>
    %4 = vector.shape_cast %3 : vector<1x1x16x4xf32> to vector<16x4xf32>
    %c0_4 = arith.constant 0 : index
    %c0_5 = arith.constant 0 : index
    %5 = vector.load %arg9[%c0_4, %c0_5] : memref<16x32xf32, #tpu.memory_space<vmem>>, vector<16x32xf32>
    %c0_6 = arith.constant 0 : index
    %c0_7 = arith.constant 0 : index
    %6 = vector.load %arg4[%c0_6, %c0_7] : memref<32x16xf32, #tpu.memory_space<vmem>>, vector<32x16xf32>
    %c0_8 = arith.constant 0 : index
    %c0_9 = arith.constant 0 : index
    %7 = vector.load %arg5[%c0_8, %c0_9] : memref<108x96xf32, #tpu.memory_space<vmem>>, vector<108x96xf32>
    %c0_10 = arith.constant 0 : index
    %c0_11 = arith.constant 0 : index
    %8 = vector.load %arg6[%c0_10, %c0_11] : memref<1x103xf32, #tpu.memory_space<vmem>>, vector<1x103xf32>
    %9 = tpu.concatenate %4, %5 in 1 : vector<16x4xf32>, vector<16x32xf32> -> vector<16x36xf32>
    %cst = arith.constant dense<0.000000e+00> : vector<32x36xf32>
    %10 = tpu.matmul %6, %9, %cst {dimension_numbers = #tpu.dot_dimension_numbers<[1], [0], [0], [1], [0, 0, 1, 1], [], []>} : vector<32x16xf32>, vector<16x36xf32>, vector<32x36xf32> -> vector<32x36xf32>
    %11 = vector.extract_strided_slice %10 {offsets = [0, 0], sizes = [16, 36], strides = [1, 1]} : vector<32x36xf32> to vector<16x36xf32>
    %12 = vector.extract_strided_slice %10 {offsets = [16, 0], sizes = [16, 36], strides = [1, 1]} : vector<32x36xf32> to vector<16x36xf32>
    %13 = vector.extract_strided_slice %11 {offsets = [0, 0], sizes = [16, 4], strides = [1, 1]} : vector<16x36xf32> to vector<16x4xf32>
    %14 = vector.extract_strided_slice %12 {offsets = [0, 0], sizes = [16, 4], strides = [1, 1]} : vector<16x36xf32> to vector<16x4xf32>
    %15 = tpu.concatenate %9, %11, %12 in 1 : vector<16x36xf32>, vector<16x36xf32>, vector<16x36xf32> -> vector<16x108xf32>
    %16 = vector.extract_strided_slice %7 {offsets = [0, 0], sizes = [108, 64], strides = [1, 1]} : vector<108x96xf32> to vector<108x64xf32>
    %cst_12 = arith.constant dense<0.000000e+00> : vector<16x64xf32>
    %17 = tpu.matmul %15, %16, %cst_12 {dimension_numbers = #tpu.dot_dimension_numbers<[1], [0], [0], [1], [0, 0, 1, 1], [], []>} : vector<16x108xf32>, vector<108x64xf32>, vector<16x64xf32> -> vector<16x64xf32>
    %18 = vector.extract_strided_slice %8 {offsets = [0, 0], sizes = [1, 64], strides = [1, 1]} : vector<1x103xf32> to vector<1x64xf32>
    %19 = vector.broadcast %18 : vector<1x64xf32> to vector<16x64xf32>
    %20 = arith.addf %17, %19 : vector<16x64xf32>
    %21 = arith.negf %20 : vector<16x64xf32>
    %22 = math.exp %21 : vector<16x64xf32>
    %cst_13 = arith.constant 1.000000e+00 : f32
    %23 = vector.broadcast %cst_13 : f32 to vector<16x64xf32>
    %24 = arith.addf %23, %22 : vector<16x64xf32>
    %25 = arith.divf %23, %24 : vector<16x64xf32>
    %26 = vector.extract_strided_slice %25 {offsets = [0, 0], sizes = [16, 32], strides = [1, 1]} : vector<16x64xf32> to vector<16x32xf32>
    %27 = vector.extract_strided_slice %25 {offsets = [0, 32], sizes = [16, 32], strides = [1, 1]} : vector<16x64xf32> to vector<16x32xf32>
    %28 = arith.mulf %5, %27 : vector<16x32xf32>
    %cst_14 = arith.constant dense<0.000000e+00> : vector<32x32xf32>
    %29 = tpu.matmul %6, %28, %cst_14 {dimension_numbers = #tpu.dot_dimension_numbers<[1], [0], [0], [1], [0, 0, 1, 1], [], []>} : vector<32x16xf32>, vector<16x32xf32>, vector<32x32xf32> -> vector<32x32xf32>
    %30 = vector.extract_strided_slice %29 {offsets = [0, 0], sizes = [16, 32], strides = [1, 1]} : vector<32x32xf32> to vector<16x32xf32>
    %31 = vector.extract_strided_slice %29 {offsets = [16, 0], sizes = [16, 32], strides = [1, 1]} : vector<32x32xf32> to vector<16x32xf32>
    %32 = tpu.concatenate %4, %28, %13, %30, %14, %31 in 1 : vector<16x4xf32>, vector<16x32xf32>, vector<16x4xf32>, vector<16x32xf32>, vector<16x4xf32>, vector<16x32xf32> -> vector<16x108xf32>
    %33 = vector.extract_strided_slice %7 {offsets = [0, 64], sizes = [108, 32], strides = [1, 1]} : vector<108x96xf32> to vector<108x32xf32>
    %cst_15 = arith.constant dense<0.000000e+00> : vector<16x32xf32>
    %34 = tpu.matmul %32, %33, %cst_15 {dimension_numbers = #tpu.dot_dimension_numbers<[1], [0], [0], [1], [0, 0, 1, 1], [], []>} : vector<16x108xf32>, vector<108x32xf32>, vector<16x32xf32> -> vector<16x32xf32>
    %35 = vector.extract_strided_slice %8 {offsets = [0, 64], sizes = [1, 32], strides = [1, 1]} : vector<1x103xf32> to vector<1x32xf32>
    %36 = vector.broadcast %35 : vector<1x32xf32> to vector<16x32xf32>
    %37 = arith.addf %34, %36 : vector<16x32xf32>
    %38 = math.tanh %37 : vector<16x32xf32>
    %39 = arith.mulf %26, %5 : vector<16x32xf32>
    %cst_16 = arith.constant 1.000000e+00 : f32
    %40 = vector.broadcast %cst_16 : f32 to vector<16x32xf32>
    %41 = arith.subf %40, %26 : vector<16x32xf32>
    %42 = arith.mulf %41, %38 : vector<16x32xf32>
    %43 = arith.addf %39, %42 : vector<16x32xf32>
    %c0_17 = arith.constant 0 : index
    %c0_18 = arith.constant 0 : index
    %44 = vector.load %arg9[%c0_17, %c0_18] : memref<16x32xf32, #tpu.memory_space<vmem>>, vector<16x32xf32>
    tpu.vector_store %arg9[%c0_17, %c0_18], %43 {strides = array<i32>} : memref<16x32xf32, #tpu.memory_space<vmem>>, vector<16x32xf32>,
    %cst_19 = arith.constant 0.000000e+00 : f32
    %45 = vector.broadcast %cst_19 : f32 to vector<16x32xf32>
    %46 = arith.maximumf %43, %45 : vector<16x32xf32>
    %c0_20 = arith.constant 0 : index
    %c0_21 = arith.constant 0 : index
    %47 = vector.load %arg7[%c0_20, %c0_21] : memref<32x7xf32, #tpu.memory_space<vmem>>, vector<32x7xf32>
    %cst_22 = arith.constant dense<0.000000e+00> : vector<16x7xf32>
    %48 = tpu.matmul %46, %47, %cst_22 {dimension_numbers = #tpu.dot_dimension_numbers<[1], [0], [0], [1], [0, 0, 1, 1], [], []>} : vector<16x32xf32>, vector<32x7xf32>, vector<16x7xf32> -> vector<16x7xf32>
    %49 = vector.extract_strided_slice %8 {offsets = [0, 96], sizes = [1, 7], strides = [1, 1]} : vector<1x103xf32> to vector<1x7xf32>
    %50 = vector.broadcast %49 : vector<1x7xf32> to vector<16x7xf32>
    %51 = arith.addf %48, %50 : vector<16x7xf32>
    %cst_23 = arith.constant 0.000000e+00 : f32
    %52 = vector.broadcast %cst_23 : f32 to vector<16x25xf32>
    %53 = tpu.concatenate %43, %51, %52 in 1 : vector<16x32xf32>, vector<16x7xf32>, vector<16x25xf32> -> vector<16x64xf32>
    %c0_24 = arith.constant 0 : index
    %c0_25 = arith.constant 0 : index
    %c0_26 = arith.constant 0 : index
    %c0_27 = arith.constant 0 : index
    %54 = vector.load %arg8[%c0_24, %c0_25, %c0_26, %c0_27] : memref<1x1x16x64xf32, #tpu.memory_space<vmem>>, vector<1x1x16x64xf32>
    %55 = vector.shape_cast %54 : vector<1x1x16x64xf32> to vector<16x64xf32>
    %56 = vector.shape_cast %53 : vector<16x64xf32> to vector<1x1x16x64xf32>
    tpu.vector_store %arg8[%c0_24, %c0_25, %c0_26, %c0_27], %56 {strides = array<i32>} : memref<1x1x16x64xf32, #tpu.memory_space<vmem>>, vector<1x1x16x64xf32>,
    return
  }
  func.func @transform_0(%arg0: i32, %arg1: i32) -> (i32, i32, i32, i32) {
    %c0_i32 = arith.constant 0 : i32
    %c0_i32_0 = arith.constant 0 : i32
    %c0_i32_1 = arith.constant 0 : i32
    return %arg0, %arg1, %c0_i32, %c0_i32_0 : i32, i32, i32, i32
  }
  func.func @transform_1(%arg0: i32, %arg1: i32) -> (i32, i32, i32) {
    %c0_i32 = arith.constant 0 : i32
    %c0_i32_0 = arith.constant 0 : i32
    %c0_i32_1 = arith.constant 0 : i32
    return %arg0, %c0_i32, %c0_i32_0 : i32, i32, i32
  }
  func.func @transform_2(%arg0: i32, %arg1: i32) -> (i32, i32) {
    %c0_i32 = arith.constant 0 : i32
    %c0_i32_0 = arith.constant 0 : i32
    %c0_i32_1 = arith.constant 0 : i32
    return %c0_i32, %c0_i32_0 : i32, i32
  }
  func.func @transform_3(%arg0: i32, %arg1: i32) -> (i32, i32) {
    %c0_i32 = arith.constant 0 : i32
    %c0_i32_0 = arith.constant 0 : i32
    %c0_i32_1 = arith.constant 0 : i32
    return %c0_i32, %c0_i32_0 : i32, i32
  }
  func.func @transform_4(%arg0: i32, %arg1: i32) -> (i32, i32) {
    %c0_i32 = arith.constant 0 : i32
    %c0_i32_0 = arith.constant 0 : i32
    %c0_i32_1 = arith.constant 0 : i32
    return %c0_i32, %c0_i32_0 : i32, i32
  }
  func.func @transform_5(%arg0: i32, %arg1: i32) -> (i32, i32) {
    %c0_i32 = arith.constant 0 : i32
    %c0_i32_0 = arith.constant 0 : i32
    %c0_i32_1 = arith.constant 0 : i32
    return %c0_i32, %c0_i32_0 : i32, i32
  }
  func.func @transform_6(%arg0: i32, %arg1: i32) -> (i32, i32, i32, i32) {
    %c0_i32 = arith.constant 0 : i32
    %c0_i32_0 = arith.constant 0 : i32
    %c0_i32_1 = arith.constant 0 : i32
    return %arg0, %arg1, %c0_i32, %c0_i32_0 : i32, i32, i32, i32
  }
}

</mosaic_0001>

<llo_original>
// kernel: t_dcrnn_rollout.1
$region0: #{t_dcrnn_rollout.1}
  #allocation0 [shape = 'u32[]', space=smem, size = 0x4, offset = 0x4, fixed_abs, tag = 'smem constant byte address 0x4 - core index']
  #allocation1 [shape = 'u32[144,128]{1,0:T(1,128)}', space=vmem, size = 0x12000, scoped, tag = 'internal scratch']
  #allocation2 [shape = 'f32[16,32]{1,0:T(8,128)}', space=vmem, size = 0x2000, scoped, tag = 'scratch operand']
  %s0 = inlined_call_operand.vmem [shape: f32[2,8,16,4], index: 0, kind: input, shape index: {}]
  %s1 = inlined_call_operand.vmem [shape: f32[2,16,32], index: 1, kind: input, shape index: {}]
  %s2 = inlined_call_operand.vmem [shape: f32[32,16], index: 2, kind: input, shape index: {}]
  %s3 = inlined_call_operand.vmem [shape: f32[108,96], index: 3, kind: input, shape index: {}]
  %s4 = inlined_call_operand.vmem [shape: f32[1,103], index: 4, kind: input, shape index: {}]
  %s5 = inlined_call_operand.vmem [shape: f32[32,7], index: 5, kind: input, shape index: {}]
  %s6 = inlined_call_operand.vmem [shape: f32[2,8,16,64], index: 6, kind: output, shape index: {}]
  %s7 = sld [smem:[#allocation0]]
  $region61: #{t_dcrnn_rollout.1} parent=0
    _
  %s9 = ssub.s32 1, %s7
  %s10 = scalar_select 0, %s9, %s7
  loop: start=0, step=1, limit=18
  $region2: #{t_dcrnn_rollout.1} parent=0 // loop_pre_header
    _
  $region3: #{t_dcrnn_rollout.1} parent=0 // loop_header
    %s12 = sphi 0, %s16
    %p13 = scmp.ge.s32.totalorder %s12, 18
    %s19 = sphi 0, %s31
    %s20 = sphi 0, %s27
    %s21 = sphi 0, %s19
    %s22 = sphi 0, %s20
    %s23 = sphi 0, %s21
    %s24 = sphi 0, %s22
    %s36 = sphi 0, %s38
    %s39 = sphi 0, %s36
    %s40 = sphi 0, %s39
    %s56 = sphi 0, %s40
    %s62 = sphi 0, %s64
    %s65 = sphi 0, %s62
    %s66 = sphi 0, %s65
    %s82 = sphi 0, %s66
    %s86 = sphi 0, %s86
    %s88 = sphi 0, %s86
    %s89 = sphi 0, %s88
    %s103 = sphi 0, %s89
    %s107 = sphi 0, %s107
    %s109 = sphi 0, %s107
    %s110 = sphi 0, %s109
    %s124 = sphi 0, %s110
    %s128 = sphi 0, %s128
    %s130 = sphi 0, %s128
    %s131 = sphi 0, %s130
    %s145 = sphi 0, %s131
    %s149 = sphi 0, %s149
    %s151 = sphi 0, %s149
    %s152 = sphi 0, %s151
    %s166 = sphi 0, %s152
    %s174 = sphi 0, %s176
    %s177 = sphi 0, %s174
    %s178 = sphi 0, %s177
    %s194 = sphi 0, %s178
  $region4: #{t_dcrnn_rollout.1} parent=0 // loop_header_branch
    %15 = sbr.rel (%p13) target = $region8
  $region5: #{t_dcrnn_rollout.1} parent=0 // loop_body
    %s17 = ssub.s32 %s12, 1
    %s18 = ssub.s32 %s12, 2
    %s25 = sadd.s32 1, %s20
    %p26 = scmp.ge.s32.totalorder %s25, 8
    %s27 = scalar_select %p26, 0, %s25
    %s28 = sadd.s32 1, %s19
    %s29 = scalar_select %p26, %s28, %s19
    %p30 = scmp.ge.s32.totalorder %s29, 2
    %s31 = scalar_select %p30, 0, %s29
    %s32 = ssub.s32 %s19, %s31
    %s33 = ssub.s32 %s20, %s27
    %s34 = sor.u32 %s32, %s33
    %p35 = scmp.eq.s32.totalorder %s34, 0
    %s37 = sadd.s32 %s36, 1
    %s38 = scalar_select %p35, %s36, %s37
    %p41 = pneg %p35
    %p42 = scmp.eq.s32.totalorder %s12, 15
    %p43 = por %p41, %p42
    %p44 = scmp.ne.s32.totalorder %s36, %s39
    %p45 = scmp.eq.s32.totalorder %s12, 0
    %p46 = por %p44, %p45
    %p47 = scmp.ne.s32.totalorder %s36, %s39
    %p48 = scmp.eq.s32.totalorder %s17, 15
    %p49 = por %p47, %p48
    %p50 = scmp.ne.s32.totalorder %s39, %s40
    %p51 = scmp.eq.s32.totalorder %s17, 0
    %p52 = por %p50, %p51
    %p53 = scmp.ne.s32.totalorder %s39, %s40
    %p54 = scmp.eq.s32.totalorder %s18, 15
    %p55 = por %p53, %p54
    %p57 = scmp.ne.s32.totalorder %s40, %s56
    %p58 = scmp.eq.s32.totalorder %s18, 0
    %p59 = por %p57, %p58
    %s60 = ssub.s32 %s19, %s31
    %p61 = scmp.eq.s32.totalorder %s60, 0
    %s63 = sadd.s32 %s62, 1
    %s64 = scalar_select %p61, %s62, %s63
    %p67 = pneg %p61
    %p68 = scmp.eq.s32.totalorder %s12, 15
    %p69 = por %p67, %p68
    %p70 = scmp.ne.s32.totalorder %s62, %s65
    %p71 = scmp.eq.s32.totalorder %s12, 0
    %p72 = por %p70, %p71
    %p73 = scmp.ne.s32.totalorder %s62, %s65
    %p74 = scmp.eq.s32.totalorder %s17, 15
    %p75 = por %p73, %p74
    %p76 = scmp.ne.s32.totalorder %s65, %s66
    %p77 = scmp.eq.s32.totalorder %s17, 0
    %p78 = por %p76, %p77
    %p79 = scmp.ne.s32.totalorder %s65, %s66
    %p80 = scmp.eq.s32.totalorder %s18, 15
    %p81 = por %p79, %p80
    %p83 = scmp.ne.s32.totalorder %s66, %s82
    %p84 = scmp.eq.s32.totalorder %s18, 0
    %p85 = por %p83, %p84
    %s87 = sadd.s32 %s86, 1
    %p90 = scmp.eq.s32.totalorder %s12, 15
    %p91 = scmp.ne.s32.totalorder %s86, %s88
    %p92 = scmp.eq.s32.totalorder %s12, 0
    %p93 = por %p91, %p92
    %p94 = scmp.ne.s32.totalorder %s86, %s88
    %p95 = scmp.eq.s32.totalorder %s17, 15
    %p96 = por %p94, %p95
    %p97 = scmp.ne.s32.totalorder %s88, %s89
    %p98 = scmp.eq.s32.totalorder %s17, 0
    %p99 = por %p97, %p98
    %p100 = scmp.ne.s32.totalorder %s88, %s89
    %p101 = scmp.eq.s32.totalorder %s18, 15
    %p102 = por %p100, %p101
    %p104 = scmp.ne.s32.totalorder %s89, %s103
    %p105 = scmp.eq.s32.totalorder %s18, 0
    %p106 = por %p104, %p105
    %s108 = sadd.s32 %s107, 1
    %p111 = scmp.eq.s32.totalorder %s12, 15
    %p112 = scmp.ne.s32.totalorder %s107, %s109
    %p113 = scmp.eq.s32.totalorder %s12, 0
    %p114 = por %p112, %p113
    %p115 = scmp.ne.s32.totalorder %s107, %s109
    %p116 = scmp.eq.s32.totalorder %s17, 15
    %p117 = por %p115, %p116
    %p118 = scmp.ne.s32.totalorder %s109, %s110
    %p119 = scmp.eq.s32.totalorder %s17, 0
    %p120 = por %p118, %p119
    %p121 = scmp.ne.s32.totalorder %s109, %s110
    %p122 = scmp.eq.s32.totalorder %s18, 15
    %p123 = por %p121, %p122
    %p125 = scmp.ne.s32.totalorder %s110, %s124
    %p126 = scmp.eq.s32.totalorder %s18, 0
    %p127 = por %p125, %p126
    %s129 = sadd.s32 %s128, 1
    %p132 = scmp.eq.s32.totalorder %s12, 15
    %p133 = scmp.ne.s32.totalorder %s128, %s130
    %p134 = scmp.eq.s32.totalorder %s12, 0
    %p135 = por %p133, %p134
    %p136 = scmp.ne.s32.totalorder %s128, %s130
    %p137 = scmp.eq.s32.totalorder %s17, 15
    %p138 = por %p136, %p137
    %p139 = scmp.ne.s32.totalorder %s130, %s131
    %p140 = scmp.eq.s32.totalorder %s17, 0
    %p141 = por %p139, %p140
    %p142 = scmp.ne.s32.totalorder %s130, %s131
    %p143 = scmp.eq.s32.totalorder %s18, 15
    %p144 = por %p142, %p143
    %p146 = scmp.ne.s32.totalorder %s131, %s145
    %p147 = scmp.eq.s32.totalorder %s18, 0
    %p148 = por %p146, %p147
    %s150 = sadd.s32 %s149, 1
    %p153 = scmp.eq.s32.totalorder %s12, 15
    %p154 = scmp.ne.s32.totalorder %s149, %s151
    %p155 = scmp.eq.s32.totalorder %s12, 0
    %p156 = por %p154, %p155
    %p157 = scmp.ne.s32.totalorder %s149, %s151
    %p158 = scmp.eq.s32.totalorder %s17, 15
    %p159 = por %p157, %p158
    %p160 = scmp.ne.s32.totalorder %s151, %s152
    %p161 = scmp.eq.s32.totalorder %s17, 0
    %p162 = por %p160, %p161
    %p163 = scmp.ne.s32.totalorder %s151, %s152
    %p164 = scmp.eq.s32.totalorder %s18, 15
    %p165 = por %p163, %p164
    %p167 = scmp.ne.s32.totalorder %s152, %s166
    %p168 = scmp.eq.s32.totalorder %s18, 0
    %p169 = por %p167, %p168
    %s170 = ssub.s32 %s19, %s31
    %s171 = ssub.s32 %s20, %s27
    %s172 = sor.u32 %s170, %s171
    %p173 = scmp.eq.s32.totalorder %s172, 0
    %s175 = sadd.s32 %s174, 1
    %s176 = scalar_select %p173, %s174, %s175
    %p179 = pneg %p173
    %p180 = scmp.eq.s32.totalorder %s12, 15
    %p181 = por %p179, %p180
    %p182 = scmp.ne.s32.totalorder %s174, %s177
    %p183 = scmp.eq.s32.totalorder %s12, 0
    %p184 = por %p182, %p183
    %p185 = scmp.ne.s32.totalorder %s174, %s177
    %p186 = scmp.eq.s32.totalorder %s17, 15
    %p187 = por %p185, %p186
    %p188 = scmp.ne.s32.totalorder %s177, %s178
    %p189 = scmp.eq.s32.totalorder %s17, 0
    %p190 = por %p188, %p189
    %p191 = scmp.ne.s32.totalorder %s177, %s178
    %p192 = scmp.eq.s32.totalorder %s18, 15
    %p193 = por %p191, %p192
    %p195 = scmp.ne.s32.totalorder %s178, %s194
    %p196 = scmp.eq.s32.totalorder %s18, 0
    %p197 = por %p195, %p196
    %p198 = scmp.le.s32.totalorder 1, %s12
    %p199 = scmp.lt.s32.totalorder %s12, 17
    %p200 = pnand %p198, %p199
    %p201 = pneg %p200
    // Predicated region
    $region9: #{t_dcrnn_rollout.1} parent=5 // pred_check
      _
    $region10: #{t_dcrnn_rollout.1} parent=5 // pred_check_branch
      %203 = sbr.rel (%p200) target = $region12
    $region11: #{t_dcrnn_rollout.1} parent=5 // pred_region
      %s204 = ssub.s32 %s12, 1
      // Predicated region
      $region13: #{t_dcrnn_rollout.1} parent=11 // pred_check
        %p205 = pneg %p99
      $region14: #{t_dcrnn_rollout.1} parent=11 // pred_check_branch
        %207 = sbr.rel (%p205) target = $region16
      $region15: #{t_dcrnn_rollout.1} parent=11 // pred_region
        _
      $region16: #{t_dcrnn_rollout.1} parent=11 // pred_fallthru
        _
      // Predicated region
      $region17: #{t_dcrnn_rollout.1} parent=11 // pred_check
        %p208 = pneg %p120
      $region18: #{t_dcrnn_rollout.1} parent=11 // pred_check_branch
        %210 = sbr.rel (%p208) target = $region20
      $region19: #{t_dcrnn_rollout.1} parent=11 // pred_region
        _
      $region20: #{t_dcrnn_rollout.1} parent=11 // pred_fallthru
        _
      // Predicated region
      $region21: #{t_dcrnn_rollout.1} parent=11 // pred_check
        %p211 = pneg %p141
      $region22: #{t_dcrnn_rollout.1} parent=11 // pred_check_branch
        %213 = sbr.rel (%p211) target = $region24
      $region23: #{t_dcrnn_rollout.1} parent=11 // pred_region
        _
      $region24: #{t_dcrnn_rollout.1} parent=11 // pred_fallthru
        _
      // Predicated region
      $region25: #{t_dcrnn_rollout.1} parent=11 // pred_check
        %p214 = pneg %p162
      $region26: #{t_dcrnn_rollout.1} parent=11 // pred_check_branch
        %216 = sbr.rel (%p214) target = $region28
      $region27: #{t_dcrnn_rollout.1} parent=11 // pred_region
        _
      $region28: #{t_dcrnn_rollout.1} parent=11 // pred_fallthru
        _
    $region12: #{t_dcrnn_rollout.1} parent=5 // pred_fallthru
      _
    %p217 = scmp.lt.s32.totalorder %s12, 16
    // Predicated region
    $region29: #{t_dcrnn_rollout.1} parent=5 // pred_check
      %p218 = pneg %p217
    $region30: #{t_dcrnn_rollout.1} parent=5 // pred_check_branch
      %220 = sbr.rel (%p218) target = $region32
    $region31: #{t_dcrnn_rollout.1} parent=5 // pred_region
      // Predicated region
      $region33: #{t_dcrnn_rollout.1} parent=31 // pred_check
        %p221 = pneg %p46
      $region34: #{t_dcrnn_rollout.1} parent=31 // pred_check_branch
        %223 = sbr.rel (%p221) target = $region36
      $region35: #{t_dcrnn_rollout.1} parent=31 // pred_region
        %p224 = scmp.lt.s32.totalorder %s19, 1
        %s225 = scalar_select %p224, %s19, 1
        %p226 = scmp.lt.s32.totalorder %s20, 7
        %s227 = scalar_select %p226, %s20, 7
        %s228 = smul.addr %s227, 2
        %s229 = smul.addr %s225, 16
        %s230 = sadd.s32 %s228, %s229
        %s231 = smul.addr %s230, 8
        %s232 = scalar_lea.vmem %s0, %s231
      $region36: #{t_dcrnn_rollout.1} parent=31 // pred_fallthru
        _
      // Predicated region
      $region37: #{t_dcrnn_rollout.1} parent=31 // pred_check
        %p233 = pneg %p72
      $region38: #{t_dcrnn_rollout.1} parent=31 // pred_check_branch
        %235 = sbr.rel (%p233) target = $region40
      $region39: #{t_dcrnn_rollout.1} parent=31 // pred_region
        %p236 = scmp.lt.s32.totalorder %s19, 1
        %s237 = scalar_select %p236, %s19, 1
        %s238 = smul.addr %s237, 2
        %s239 = smul.addr %s238, 8
        %s240 = scalar_lea.vmem %s1, %s239
      $region40: #{t_dcrnn_rollout.1} parent=31 // pred_fallthru
        _
    $region32: #{t_dcrnn_rollout.1} parent=5 // pred_fallthru
      _
    %p241 = scmp.le.s32.totalorder 1, %s12
    %p242 = scmp.lt.s32.totalorder %s12, 17
    %p243 = pnand %p241, %p242
    %p244 = pneg %p243
    // Predicated region
    $region41: #{t_dcrnn_rollout.1} parent=5 // pred_check
      _
    $region42: #{t_dcrnn_rollout.1} parent=5 // pred_check_branch
      %246 = sbr.rel (%p243) target = $region44
    $region43: #{t_dcrnn_rollout.1} parent=5 // pred_region
      %s247 = ssub.s32 %s12, 1
      %p248 = scmp.lt.s32.totalorder %s21, 1
      %s249 = scalar_select %p248, %s21, 1
      %p250 = scmp.lt.s32.totalorder %s22, 7
      %s251 = scalar_select %p250, %s22, 7
      %s252 = smul.addr %s251, 2
      %s253 = smul.addr %s249, 16
      %s254 = sadd.s32 %s252, %s253
      %s255 = smul.addr %s254, 8
      %s256 = scalar_lea.vmem %s0, %s255
      %p257 = pneg %p52
      %p258 = pneg %p49
      %p259 = scmp.lt.s32.totalorder %s21, 1
      %s260 = scalar_select %p259, %s21, 1
      %s261 = smul.addr %s260, 2
      %s262 = smul.addr %s261, 8
      %s263 = scalar_lea.vmem %s1, %s262
      %p264 = pneg %p78
      %p265 = pneg %p75
      %p266 = pneg %p99
      %p267 = pneg %p96
      %p268 = pneg %p120
      %p269 = pneg %p117
      %p270 = pneg %p141
      %p271 = pneg %p138
      %p272 = pneg %p162
      %p273 = pneg %p159
      %p274 = pneg %p190
      %p275 = pneg %p187
      %p276 = scmp.lt.s32.totalorder %s21, 1
      %s277 = scalar_select %p276, %s21, 1
      %p278 = scmp.lt.s32.totalorder %s22, 7
      %s279 = scalar_select %p278, %s22, 7
      %s280 = smul.addr %s279, 2
      %s281 = smul.addr %s277, 16
      %s282 = sadd.s32 %s280, %s281
      %s283 = smul.addr %s282, 8
      %s284 = scalar_lea.vmem %s6, %s283
      %p285 = scmp.lt.s32.totalorder %s21, 1
      %s286 = scalar_select %p285, %s21, 1
      %p287 = scmp.lt.s32.totalorder %s22, 7
      %s288 = scalar_select %p287, %s22, 7
      %s289 = smul.addr %s288, 2
      %s290 = smul.addr %s286, 16
      %s291 = sadd.s32 %s289, %s290
      %s292 = smul.addr %s291, 8
      %s293 = scalar_lea.vmem %s0, %s292
      %p294 = scmp.lt.s32.totalorder %s21, 1
      %s295 = scalar_select %p294, %s21, 1
      %s296 = smul.addr %s295, 2
      %s297 = smul.addr %s296, 8
      %s298 = scalar_lea.vmem %s1, %s297
      %p299 = scmp.lt.s32.totalorder %s21, 1
      %s300 = scalar_select %p299, %s21, 1
      %p301 = scmp.lt.s32.totalorder %s22, 7
      %s302 = scalar_select %p301, %s22, 7
      %s303 = smul.addr %s302, 2
      %s304 = smul.addr %s300, 16
      %s305 = sadd.s32 %s303, %s304
      %s306 = smul.addr %s305, 8
      %s307 = scalar_lea.vmem %s6, %s306
      %p308 = scmp.eq.s32.totalorder %s22, 0
      // Predicated region
      $region45: #{t_dcrnn_rollout.1} parent=43 // pred_check
        %p309 = pneg %p308
      $region46: #{t_dcrnn_rollout.1} parent=43 // pred_check_branch
        %311 = sbr.rel (%p309) target = $region48
      $region47: #{t_dcrnn_rollout.1} parent=43 // pred_region
        %v312 = vld [vmem:[%s298] sm:$0xff]
        %v313 = vld [vmem:[%s298 + $0x8] sm:$0xff]
        %vm314 = vcmask 261120
        %315 = vst.msk [vmem:[#allocation2] sm:$0xff] %vm314, %v312
        %316 = vst.msk [vmem:[#allocation2 + $0x8] sm:$0xff] %vm314, %v313
      $region48: #{t_dcrnn_rollout.1} parent=43 // pred_fallthru
        _
      %v317 = vld [vmem:[%s293] sm:$0xff]
      %v318 = vld [vmem:[%s293 + $0x8] sm:$0xff]
      %v319 = vld [vmem:[#allocation2] sm:$0xff]
      %v320 = vld [vmem:[#allocation2 + $0x8] sm:$0xff]
      %v321 = vld [vmem:[%s2] sm:$0xff]
      %v322 = vld [vmem:[%s2 + $0x8] sm:$0xff]
      %v323 = vld [vmem:[%s2 + $0x10] sm:$0xff]
      %v324 = vld [vmem:[%s2 + $0x18] sm:$0xff]
      %v325 = vld [vmem:[%s3] sm:$0xff]
      %v326 = vld [vmem:[%s3 + $0x8] sm:$0xff]
      %v327 = vld [vmem:[%s3 + $0x10] sm:$0xff]
      %v328 = vld [vmem:[%s3 + $0x18] sm:$0xff]
      %v329 = vld [vmem:[%s3 + $0x20] sm:$0xff]
      %v330 = vld [vmem:[%s3 + $0x28] sm:$0xff]
      %v331 = vld [vmem:[%s3 + $0x30] sm:$0xff]
      %v332 = vld [vmem:[%s3 + $0x38] sm:$0xff]
      %v333 = vld [vmem:[%s3 + $0x40] sm:$0xff]
      %v334 = vld [vmem:[%s3 + $0x48] sm:$0xff]
      %v335 = vld [vmem:[%s3 + $0x50] sm:$0xff]
      %v336 = vld [vmem:[%s3 + $0x58] sm:$0xff]
      %v337 = vld [vmem:[%s3 + $0x60] sm:$0xff]
      %v338 = vld [vmem:[%s3 + $0x68] sm:$0xf]
      %v339 = vld [vmem:[%s4] sm:$0x1]
      %342 = vrot.lane.b32.xlu0 %v319, 4
      %v343 = vpop.permute.xlu0 %342
      %344 = vrot.lane.b32.xlu0 %v320, 4
      %v345 = vpop.permute.xlu0 %344
      %vm348 = vcmask 31744
      %v349 = vsel %vm348, %v317, %v343
      %v350 = vsel %vm348, %v318, %v345
      %vm351 = vcmask 130048
      %v353 = vsel %vm351, %v321, 0
      %v356 = vsel %vm351, %v322, 0
      %v359 = vsel %vm351, %v323, 0
      %v362 = vsel %vm351, %v324, 0
      %364 = vmatprep.subr.mxu0 0.0
      %365 = vmatpush1.msra.mxu0 %v349
      %366 = vmatprep.subr.mxu0 0.0
      %367 = vmatpush1.msra.mxu0 %v350
      %368 = vmatprep.subr.mxu0 0.0
      %369 = vmatpush1.msra.mxu0 0.0
      %370 = vmatprep.subr.mxu0 0.0
      %371 = vmatpush1.msra.mxu0 0.0
      %372 = vmatprep.subr.mxu0 0.0
      %373 = vmatpush1.msra.mxu0 0.0
      %374 = vmatprep.subr.mxu0 0.0
      %375 = vmatpush1.msra.mxu0 0.0
      %376 = vmatprep.subr.mxu0 0.0
      %377 = vmatpush1.msra.mxu0 0.0
      %378 = vmatprep.subr.mxu0 0.0
      %379 = vmatpush1.msra.mxu0 0.0
      %380 = vmatprep.subr.mxu0 0.0
      %381 = vmatpush1.msra.mxu0 0.0
      %382 = vmatprep.subr.mxu0 0.0
      %383 = vmatpush1.msra.mxu0 0.0
      %384 = vmatprep.subr.mxu0 0.0
      %385 = vmatpush1.msra.mxu0 0.0
      %386 = vmatprep.subr.mxu0 0.0
      %387 = vmatpush1.msra.mxu0 0.0
      %388 = vmatprep.subr.mxu0 0.0
      %389 = vmatpush1.msra.mxu0 0.0
      %390 = vmatprep.subr.mxu0 0.0
      %391 = vmatpush1.msra.mxu0 0.0
      %392 = vmatprep.subr.mxu0 0.0
      %393 = vmatpush1.msra.mxu0 0.0
      %394 = vmatprep.subr.mxu0 0.0
      %395 = vmatpush1.msra.mxu0 0.0
      %396 = vmatprep.subr.mxu0 0.0
      %397 = vmatpush1.msra.mxu0 0.0
      %398 = vmatprep.subr.mxu0 0.0
      %399 = vmatpush1.msra.mxu0 0.0
      %400 = vmatprep.subr.mxu0 0.0
      %401 = vmatpush1.msra.mxu0 0.0
      %402 = vmatprep.subr.mxu0 0.0
      %403 = vmatpush1.msra.mxu0 0.0
      %404 = vmatprep.subr.mxu0 0.0
      %405 = vmatpush1.msra.mxu0 0.0
      %406 = vmatprep.subr.mxu0 0.0
      %407 = vmatpush1.msra.mxu0 0.0
      %408 = vmatprep.subr.mxu0 0.0
      %409 = vmatpush1.msra.mxu0 0.0
      %410 = vmatprep.subr.mxu0 0.0
      %411 = vmatpush1.msra.mxu0 0.0
      %412 = vmatprep.subr.mxu0 0.0
      %413 = vmatpush1.msra.mxu0 0.0
      %414 = vmatprep.subr.mxu0 0.0
      %415 = vmatpush1.msra.mxu0 0.0
      %416 = vmatprep.subr.mxu0 0.0
      %417 = vmatpush1.msra.mxu0 0.0
      %418 = vmatprep.subr.mxu0 0.0
      %419 = vmatpush1.msra.mxu0 0.0
      %420 = vmatprep.subr.mxu0 0.0
      %421 = vmatpush1.msra.mxu0 0.0
      %422 = vmatprep.subr.mxu0 0.0
      %423 = vmatpush1.msra.mxu0 0.0
      %424 = vmatprep.subr.mxu0 0.0
      %425 = vmatpush1.msra.mxu0 0.0
      %426 = vmatprep.subr.mxu0 0.0
      %427 = vmatpush1.msra.mxu0 0.0
      %428 = vmatprep.mubr.f32.mxu0 0.0
      %429 = vmatmul.mubr.f32.gmra.mrb[0].mxu0 %v353
      %v430 = vpop.f32.mrb[0].mxu0
      %v431 = vadd.f32 0.0, %v430
      %v432 = vpop.f32.mrb[0].mxu0
      %433 = vmatprep.mubr.f32.mxu0 0.0
      %434 = vmatmul.mubr.f32.gmra.mrb[0].mxu0 %v356
      %v435 = vpop.f32.mrb[0].mxu0
      %v436 = vadd.f32 0.0, %v435
      %v437 = vpop.f32.mrb[0].mxu0
      %438 = vmatprep.mubr.f32.mxu0 0.0
      %439 = vmatmul.mubr.f32.gmra.mrb[0].mxu0 %v359
      %v440 = vpop.f32.mrb[0].mxu0
      %v441 = vadd.f32 0.0, %v440
      %v442 = vpop.f32.mrb[0].mxu0
      %443 = vmatprep.mubr.f32.mxu0 0.0
      %444 = vmatmul.mubr.f32.gmra.mrb[0].mxu0 %v362
      %v445 = vpop.f32.mrb[0].mxu0
      %v446 = vadd.f32 0.0, %v445
      %v447 = vpop.f32.mrb[0].mxu0
      %448 = vdwg.mxu0
      %451 = vrot.lane.b32.xlu0 %v431, 36
      %v452 = vpop.permute.xlu0 %451
      %453 = vrot.lane.b32.xlu0 %v436, 36
      %v454 = vpop.permute.xlu0 %453
      %459 = vrot.lane.b32.xlu0 %v441, 72
      %v460 = vpop.permute.xlu0 %459
      %461 = vrot.lane.b32.xlu0 %v446, 72
      %v462 = vpop.permute.xlu0 %461
      %vm465 = vcmask 293888
      %v466 = vsel %vm465, %v349, %v452
      %v467 = vsel %vm465, %v350, %v454
      %vm468 = vcmask 588800
      %v469 = vsel %vm468, %v466, %v460
      %v470 = vsel %vm468, %v467, %v462
      %v472 = vlaneseq
      %v473 = vshrl.u32 %v472, 7
      %v474 = vsub.s32 0, %v473
      %v475 = vrot.slane %v339, %v474
      %vm477 = vcmask 883712
      %v479 = vsel %vm477, %v469, 0
      %v482 = vsel %vm477, %v470, 0
      %vm484 = vcmask 1043456
      %v486 = vsel %vm484, %v338, 0
      %488 = vmatprep.subr.mxu0 0.0
      %489 = vmatpush1.msra.mxu0 %v325
      %490 = vmatprep.subr.mxu0 0.0
      %491 = vmatpush1.msra.mxu0 %v326
      %492 = vmatprep.subr.mxu0 0.0
      %493 = vmatpush1.msra.mxu0 %v327
      %494 = vmatprep.subr.mxu0 0.0
      %495 = vmatpush1.msra.mxu0 %v328
      %496 = vmatprep.subr.mxu0 0.0
      %497 = vmatpush1.msra.mxu0 %v329
      %498 = vmatprep.subr.mxu0 0.0
      %499 = vmatpush1.msra.mxu0 %v330
      %500 = vmatprep.subr.mxu0 0.0
      %501 = vmatpush1.msra.mxu0 %v331
      %502 = vmatprep.subr.mxu0 0.0
      %503 = vmatpush1.msra.mxu0 %v332
      %504 = vmatprep.subr.mxu0 0.0
      %505 = vmatpush1.msra.mxu0 %v333
      %506 = vmatprep.subr.mxu0 0.0
      %507 = vmatpush1.msra.mxu0 %v334
      %508 = vmatprep.subr.mxu0 0.0
      %509 = vmatpush1.msra.mxu0 %v335
      %510 = vmatprep.subr.mxu0 0.0
      %511 = vmatpush1.msra.mxu0 %v336
      %512 = vmatprep.subr.mxu0 0.0
      %513 = vmatpush1.msra.mxu0 %v337
      %514 = vmatprep.subr.mxu0 0.0
      %515 = vmatpush1.msra.mxu0 %v486
      %516 = vmatprep.subr.mxu0 0.0
      %517 = vmatpush1.msra.mxu0 0.0
      %518 = vmatprep.subr.mxu0 0.0
      %519 = vmatpush1.msra.mxu0 0.0
      %520 = vmatprep.subr.mxu0 0.0
      %521 = vmatpush1.msra.mxu0 0.0
      %522 = vmatprep.subr.mxu0 0.0
      %523 = vmatpush1.msra.mxu0 0.0
      %524 = vmatprep.subr.mxu0 0.0
      %525 = vmatpush1.msra.mxu0 0.0
      %526 = vmatprep.subr.mxu0 0.0
      %527 = vmatpush1.msra.mxu0 0.0
      %528 = vmatprep.subr.mxu0 0.0
      %529 = vmatpush1.msra.mxu0 0.0
      %530 = vmatprep.subr.mxu0 0.0
      %531 = vmatpush1.msra.mxu0 0.0
      %532 = vmatprep.subr.mxu0 0.0
      %533 = vmatpush1.msra.mxu0 0.0
      %534 = vmatprep.subr.mxu0 0.0
      %535 = vmatpush1.msra.mxu0 0.0
      %536 = vmatprep.subr.mxu0 0.0
      %537 = vmatpush1.msra.mxu0 0.0
      %538 = vmatprep.subr.mxu0 0.0
      %539 = vmatpush1.msra.mxu0 0.0
      %540 = vmatprep.subr.mxu0 0.0
      %541 = vmatpush1.msra.mxu0 0.0
      %542 = vmatprep.subr.mxu0 0.0
      %543 = vmatpush1.msra.mxu0 0.0
      %544 = vmatprep.subr.mxu0 0.0
      %545 = vmatpush1.msra.mxu0 0.0
      %546 = vmatprep.subr.mxu0 0.0
      %547 = vmatpush1.msra.mxu0 0.0
      %548 = vmatprep.subr.mxu0 0.0
      %549 = vmatpush1.msra.mxu0 0.0
      %550 = vmatprep.subr.mxu0 0.0
      %551 = vmatpush1.msra.mxu0 0.0
      %552 = vmatprep.mubr.f32.mxu0 0.0
      %553 = vmatmul.mubr.f32.gmra.mrb[0].mxu0 %v479
      %v554 = vpop.f32.mrb[0].mxu0
      %v555 = vadd.f32 %v475, %v554
      %v556 = vpop.f32.mrb[0].mxu0
      %557 = vmatprep.mubr.f32.mxu0 0.0
      %558 = vmatmul.mubr.f32.gmra.mrb[0].mxu0 %v482
      %v559 = vpop.f32.mrb[0].mxu0
      %v560 = vadd.f32 %v475, %v559
      %v561 = vpop.f32.mrb[0].mxu0
      %562 = vdwg.mxu0
      %v563 = vxor.u32 %v555, 2147483648
      %v564 = vxor.u32 %v560, 2147483648
      %v565 = vmul.f32 %v563, 1.442695
      %v566 = vpow.pop %v565
      %v567 = vmul.f32 %v564, 1.442695
      %v568 = vpow.pop %v567
      %v569 = vadd.f32 %v566, 1.0
      %v570 = vadd.f32 %v568, 1.0
      %v571 = vrcp.pop %v569
      %v572 = vmul.f32 1.0, %v571
      %v573 = vrcp.pop %v570
      %v574 = vmul.f32 1.0, %v573
      %577 = vrot.lane.b32.xlu0 %v572, 96
      %v578 = vpop.permute.xlu0 %577
      %579 = vrot.lane.b32.xlu0 %v574, 96
      %v580 = vpop.permute.xlu0 %579
      %v583 = vmul.f32 %v319, %v578
      %v584 = vmul.f32 %v320, %v580
      %585 = vmatprep.subr.mxu0 0.0
      %586 = vmatpush1.msra.mxu0 %v583
      %587 = vmatprep.subr.mxu0 0.0
      %588 = vmatpush1.msra.mxu0 %v584
      %589 = vmatprep.subr.mxu0 0.0
      %590 = vmatpush1.msra.mxu0 0.0
      %591 = vmatprep.subr.mxu0 0.0
      %592 = vmatpush1.msra.mxu0 0.0
      %593 = vmatprep.subr.mxu0 0.0
      %594 = vmatpush1.msra.mxu0 0.0
      %595 = vmatprep.subr.mxu0 0.0
      %596 = vmatpush1.msra.mxu0 0.0
      %597 = vmatprep.subr.mxu0 0.0
      %598 = vmatpush1.msra.mxu0 0.0
      %599 = vmatprep.subr.mxu0 0.0
      %600 = vmatpush1.msra.mxu0 0.0
      %601 = vmatprep.subr.mxu0 0.0
      %602 = vmatpush1.msra.mxu0 0.0
      %603 = vmatprep.subr.mxu0 0.0
      %604 = vmatpush1.msra.mxu0 0.0
      %605 = vmatprep.subr.mxu0 0.0
      %606 = vmatpush1.msra.mxu0 0.0
      %607 = vmatprep.subr.mxu0 0.0
      %608 = vmatpush1.msra.mxu0 0.0
      %609 = vmatprep.subr.mxu0 0.0
      %610 = vmatpush1.msra.mxu0 0.0
      %611 = vmatprep.subr.mxu0 0.0
      %612 = vmatpush1.msra.mxu0 0.0
      %613 = vmatprep.subr.mxu0 0.0
      %614 = vmatpush1.msra.mxu0 0.0
      %615 = vmatprep.subr.mxu0 0.0
      %616 = vmatpush1.msra.mxu0 0.0
      %617 = vmatprep.subr.mxu0 0.0
      %618 = vmatpush1.msra.mxu0 0.0
      %619 = vmatprep.subr.mxu0 0.0
      %620 = vmatpush1.msra.mxu0 0.0
      %621 = vmatprep.subr.mxu0 0.0
      %622 = vmatpush1.msra.mxu0 0.0
      %623 = vmatprep.subr.mxu0 0.0
      %624 = vmatpush1.msra.mxu0 0.0
      %625 = vmatprep.subr.mxu0 0.0
      %626 = vmatpush1.msra.mxu0 0.0
      %627 = vmatprep.subr.mxu0 0.0
      %628 = vmatpush1.msra.mxu0 0.0
      %629 = vmatprep.subr.mxu0 0.0
      %630 = vmatpush1.msra.mxu0 0.0
      %631 = vmatprep.subr.mxu0 0.0
      %632 = vmatpush1.msra.mxu0 0.0
      %633 = vmatprep.subr.mxu0 0.0
      %634 = vmatpush1.msra.mxu0 0.0
      %635 = vmatprep.subr.mxu0 0.0
      %636 = vmatpush1.msra.mxu0 0.0
      %637 = vmatprep.subr.mxu0 0.0
      %638 = vmatpush1.msra.mxu0 0.0
      %639 = vmatprep.subr.mxu0 0.0
      %640 = vmatpush1.msra.mxu0 0.0
      %641 = vmatprep.subr.mxu0 0.0
      %642 = vmatpush1.msra.mxu0 0.0
      %643 = vmatprep.subr.mxu0 0.0
      %644 = vmatpush1.msra.mxu0 0.0
      %645 = vmatprep.subr.mxu0 0.0
      %646 = vmatpush1.msra.mxu0 0.0
      %647 = vmatprep.subr.mxu0 0.0
      %648 = vmatpush1.msra.mxu0 0.0
      %649 = vmatprep.mubr.f32.mxu0 0.0
      %650 = vmatmul.mubr.f32.gmra.mrb[0].mxu0 %v353
      %v651 = vpop.f32.mrb[0].mxu0
      %v652 = vadd.f32 0.0, %v651
      %v653 = vpop.f32.mrb[0].mxu0
      %654 = vmatprep.mubr.f32.mxu0 0.0
      %655 = vmatmul.mubr.f32.gmra.mrb[0].mxu0 %v356
      %v656 = vpop.f32.mrb[0].mxu0
      %v657 = vadd.f32 0.0, %v656
      %v658 = vpop.f32.mrb[0].mxu0
      %659 = vmatprep.mubr.f32.mxu0 0.0
      %660 = vmatmul.mubr.f32.gmra.mrb[0].mxu0 %v359
      %v661 = vpop.f32.mrb[0].mxu0
      %v662 = vadd.f32 0.0, %v661
      %v663 = vpop.f32.mrb[0].mxu0
      %664 = vmatprep.mubr.f32.mxu0 0.0
      %665 = vmatmul.mubr.f32.gmra.mrb[0].mxu0 %v362
      %v666 = vpop.f32.mrb[0].mxu0
      %v667 = vadd.f32 0.0, %v666
      %v668 = vpop.f32.mrb[0].mxu0
      %669 = vdwg.mxu0
      %672 = vrot.lane.b32.xlu0 %v583, 4
      %v673 = vpop.permute.xlu0 %672
      %674 = vrot.lane.b32.xlu0 %v584, 4
      %v675 = vpop.permute.xlu0 %674
      %680 = vrot.lane.b32.xlu0 %v652, 40
      %v681 = vpop.permute.xlu0 %680
      %682 = vrot.lane.b32.xlu0 %v657, 40
      %v683 = vpop.permute.xlu0 %682
      %688 = vrot.lane.b32.xlu0 %v662, 76
      %v689 = vpop.permute.xlu0 %688
      %690 = vrot.lane.b32.xlu0 %v667, 76
      %v691 = vpop.permute.xlu0 %690
      %v694 = vsel %vm348, %v317, %v673
      %v695 = vsel %vm348, %v318, %v675
      %v696 = vsel %vm465, %v694, %v452
      %v697 = vsel %vm465, %v695, %v454
      %vm698 = vcmask 326656
      %v699 = vsel %vm698, %v696, %v681
      %v700 = vsel %vm698, %v697, %v683
      %v701 = vsel %vm468, %v699, %v460
      %v702 = vsel %vm468, %v700, %v462
      %vm703 = vcmask 621568
      %v704 = vsel %vm703, %v701, %v689
      %v705 = vsel %vm703, %v702, %v691
      %719 = vrot.lane.b32.xlu0 %v325, 64
      %v720 = vpop.permute.xlu0 %719
      %721 = vrot.lane.b32.xlu0 %v326, 64
      %v722 = vpop.permute.xlu0 %721
      %723 = vrot.lane.b32.xlu0 %v327, 64
      %v724 = vpop.permute.xlu0 %723
      %725 = vrot.lane.b32.xlu0 %v328, 64
      %v726 = vpop.permute.xlu0 %725
      %727 = vrot.lane.b32.xlu0 %v329, 64
      %v728 = vpop.permute.xlu0 %727
      %729 = vrot.lane.b32.xlu0 %v330, 64
      %v730 = vpop.permute.xlu0 %729
      %731 = vrot.lane.b32.xlu0 %v331, 64
      %v732 = vpop.permute.xlu0 %731
      %733 = vrot.lane.b32.xlu0 %v332, 64
      %v734 = vpop.permute.xlu0 %733
      %735 = vrot.lane.b32.xlu0 %v333, 64
      %v736 = vpop.permute.xlu0 %735
      %737 = vrot.lane.b32.xlu0 %v334, 64
      %v738 = vpop.permute.xlu0 %737
      %739 = vrot.lane.b32.xlu0 %v335, 64
      %v740 = vpop.permute.xlu0 %739
      %741 = vrot.lane.b32.xlu0 %v336, 64
      %v742 = vpop.permute.xlu0 %741
      %743 = vrot.lane.b32.xlu0 %v337, 64
      %v744 = vpop.permute.xlu0 %743
      %745 = vrot.lane.b32.xlu0 %v338, 64
      %v746 = vpop.permute.xlu0 %745
      %760 = vrot.lane.b32.xlu0 %v475, 64
      %v761 = vpop.permute.xlu0 %760
      %v764 = vsel %vm477, %v704, 0
      %v767 = vsel %vm477, %v705, 0
      %v769 = vsel %vm484, %v746, 0
      %771 = vmatprep.subr.mxu0 0.0
      %772 = vmatpush1.msra.mxu0 %v720
      %773 = vmatprep.subr.mxu0 0.0
      %774 = vmatpush1.msra.mxu0 %v722
      %775 = vmatprep.subr.mxu0 0.0
      %776 = vmatpush1.msra.mxu0 %v724
      %777 = vmatprep.subr.mxu0 0.0
      %778 = vmatpush1.msra.mxu0 %v726
      %779 = vmatprep.subr.mxu0 0.0
      %780 = vmatpush1.msra.mxu0 %v728
      %781 = vmatprep.subr.mxu0 0.0
      %782 = vmatpush1.msra.mxu0 %v730
      %783 = vmatprep.subr.mxu0 0.0
      %784 = vmatpush1.msra.mxu0 %v732
      %785 = vmatprep.subr.mxu0 0.0
      %786 = vmatpush1.msra.mxu0 %v734
      %787 = vmatprep.subr.mxu0 0.0
      %788 = vmatpush1.msra.mxu0 %v736
      %789 = vmatprep.subr.mxu0 0.0
      %790 = vmatpush1.msra.mxu0 %v738
      %791 = vmatprep.subr.mxu0 0.0
      %792 = vmatpush1.msra.mxu0 %v740
      %793 = vmatprep.subr.mxu0 0.0
      %794 = vmatpush1.msra.mxu0 %v742
      %795 = vmatprep.subr.mxu0 0.0
      %796 = vmatpush1.msra.mxu0 %v744
      %797 = vmatprep.subr.mxu0 0.0
      %798 = vmatpush1.msra.mxu0 %v769
      %799 = vmatprep.subr.mxu0 0.0
      %800 = vmatpush1.msra.mxu0 0.0
      %801 = vmatprep.subr.mxu0 0.0
      %802 = vmatpush1.msra.mxu0 0.0
      %803 = vmatprep.subr.mxu0 0.0
      %804 = vmatpush1.msra.mxu0 0.0
      %805 = vmatprep.subr.mxu0 0.0
      %806 = vmatpush1.msra.mxu0 0.0
      %807 = vmatprep.subr.mxu0 0.0
      %808 = vmatpush1.msra.mxu0 0.0
      %809 = vmatprep.subr.mxu0 0.0
      %810 = vmatpush1.msra.mxu0 0.0
      %811 = vmatprep.subr.mxu0 0.0
      %812 = vmatpush1.msra.mxu0 0.0
      %813 = vmatprep.subr.mxu0 0.0
      %814 = vmatpush1.msra.mxu0 0.0
      %815 = vmatprep.subr.mxu0 0.0
      %816 = vmatpush1.msra.mxu0 0.0
      %817 = vmatprep.subr.mxu0 0.0
      %818 = vmatpush1.msra.mxu0 0.0
      %819 = vmatprep.subr.mxu0 0.0
      %820 = vmatpush1.msra.mxu0 0.0
      %821 = vmatprep.subr.mxu0 0.0
      %822 = vmatpush1.msra.mxu0 0.0
      %823 = vmatprep.subr.mxu0 0.0
      %824 = vmatpush1.msra.mxu0 0.0
      %825 = vmatprep.subr.mxu0 0.0
      %826 = vmatpush1.msra.mxu0 0.0
      %827 = vmatprep.subr.mxu0 0.0
      %828 = vmatpush1.msra.mxu0 0.0
      %829 = vmatprep.subr.mxu0 0.0
      %830 = vmatpush1.msra.mxu0 0.0
      %831 = vmatprep.subr.mxu0 0.0
      %832 = vmatpush1.msra.mxu0 0.0
      %833 = vmatprep.subr.mxu0 0.0
      %834 = vmatpush1.msra.mxu0 0.0
      %835 = vmatprep.mubr.f32.mxu0 0.0
      %836 = vmatmul.mubr.f32.gmra.mrb[0].mxu0 %v764
      %v837 = vpop.f32.mrb[0].mxu0
      %v838 = vadd.f32 %v761, %v837
      %v839 = vpop.f32.mrb[0].mxu0
      %840 = vmatprep.mubr.f32.mxu0 0.0
      %841 = vmatmul.mubr.f32.gmra.mrb[0].mxu0 %v767
      %v842 = vpop.f32.mrb[0].mxu0
      %v843 = vadd.f32 %v761, %v842
      %v844 = vpop.f32.mrb[0].mxu0
      %845 = vdwg.mxu0
      %v846 = vtanh.pop %v838
      %v847 = vtanh.pop %v843
      %v848 = vmul.f32 %v572, %v319
      %v849 = vmul.f32 %v574, %v320
      %v850 = vsub.f32 1.0, %v572
      %v851 = vsub.f32 1.0, %v574
      %v852 = vmul.f32 %v850, %v846
      %v853 = vmul.f32 %v851, %v847
      %v854 = vadd.f32 %v848, %v852
      %v855 = vadd.f32 %v849, %v853
      %vm856 = vcmask 261120
      %857 = vst.msk [vmem:[#allocation2] sm:$0xff] %vm856, %v854
      %858 = vst.msk [vmem:[#allocation2 + $0x8] sm:$0xff] %vm856, %v855
      %v859 = vmax.f32 %v854, 0.0
      %v860 = vmax.f32 %v855, 0.0
      %v861 = vld [vmem:[%s5] sm:$0xff]
      %v862 = vld [vmem:[%s5 + $0x8] sm:$0xff]
      %v863 = vld [vmem:[%s5 + $0x10] sm:$0xff]
      %v864 = vld [vmem:[%s5 + $0x18] sm:$0xff]
      %865 = vrot.lane.b32.xlu0 %v475, 32
      %v866 = vpop.permute.xlu0 %865
      %v869 = vsel %vm856, %v859, 0
      %v872 = vsel %vm856, %v860, 0
      %874 = vmatprep.subr.mxu0 0.0
      %875 = vmatpush1.msra.mxu0 %v861
      %876 = vmatprep.subr.mxu0 0.0
      %877 = vmatpush1.msra.mxu0 %v862
      %878 = vmatprep.subr.mxu0 0.0
      %879 = vmatpush1.msra.mxu0 %v863
      %880 = vmatprep.subr.mxu0 0.0
      %881 = vmatpush1.msra.mxu0 %v864
      %882 = vmatprep.subr.mxu0 0.0
      %883 = vmatpush1.msra.mxu0 0.0
      %884 = vmatprep.subr.mxu0 0.0
      %885 = vmatpush1.msra.mxu0 0.0
      %886 = vmatprep.subr.mxu0 0.0
      %887 = vmatpush1.msra.mxu0 0.0
      %888 = vmatprep.subr.mxu0 0.0
      %889 = vmatpush1.msra.mxu0 0.0
      %890 = vmatprep.subr.mxu0 0.0
      %891 = vmatpush1.msra.mxu0 0.0
      %892 = vmatprep.subr.mxu0 0.0
      %893 = vmatpush1.msra.mxu0 0.0
      %894 = vmatprep.subr.mxu0 0.0
      %895 = vmatpush1.msra.mxu0 0.0
      %896 = vmatprep.subr.mxu0 0.0
      %897 = vmatpush1.msra.mxu0 0.0
      %898 = vmatprep.subr.mxu0 0.0
      %899 = vmatpush1.msra.mxu0 0.0
      %900 = vmatprep.subr.mxu0 0.0
      %901 = vmatpush1.msra.mxu0 0.0
      %902 = vmatprep.subr.mxu0 0.0
      %903 = vmatpush1.msra.mxu0 0.0
      %904 = vmatprep.subr.mxu0 0.0
      %905 = vmatpush1.msra.mxu0 0.0
      %906 = vmatprep.subr.mxu0 0.0
      %907 = vmatpush1.msra.mxu0 0.0
      %908 = vmatprep.subr.mxu0 0.0
      %909 = vmatpush1.msra.mxu0 0.0
      %910 = vmatprep.subr.mxu0 0.0
      %911 = vmatpush1.msra.mxu0 0.0
      %912 = vmatprep.subr.mxu0 0.0
      %913 = vmatpush1.msra.mxu0 0.0
      %914 = vmatprep.subr.mxu0 0.0
      %915 = vmatpush1.msra.mxu0 0.0
      %916 = vmatprep.subr.mxu0 0.0
      %917 = vmatpush1.msra.mxu0 0.0
      %918 = vmatprep.subr.mxu0 0.0
      %919 = vmatpush1.msra.mxu0 0.0
      %920 = vmatprep.subr.mxu0 0.0
      %921 = vmatpush1.msra.mxu0 0.0
      %922 = vmatprep.subr.mxu0 0.0
      %923 = vmatpush1.msra.mxu0 0.0
      %924 = vmatprep.subr.mxu0 0.0
      %925 = vmatpush1.msra.mxu0 0.0
      %926 = vmatprep.subr.mxu0 0.0
      %927 = vmatpush1.msra.mxu0 0.0
      %928 = vmatprep.subr.mxu0 0.0
      %929 = vmatpush1.msra.mxu0 0.0
      %930 = vmatprep.subr.mxu0 0.0
      %931 = vmatpush1.msra.mxu0 0.0
      %932 = vmatprep.subr.mxu0 0.0
      %933 = vmatpush1.msra.mxu0 0.0
      %934 = vmatprep.subr.mxu0 0.0
      %935 = vmatpush1.msra.mxu0 0.0
      %936 = vmatprep.subr.mxu0 0.0
      %937 = vmatpush1.msra.mxu0 0.0
      %938 = vmatprep.mubr.f32.mxu0 0.0
      %939 = vmatmul.mubr.f32.gmra.mrb[0].mxu0 %v869
      %v940 = vpop.f32.mrb[0].mxu0
      %v941 = vadd.f32 %v866, %v940
      %v942 = vpop.f32.mrb[0].mxu0
      %943 = vmatprep.mubr.f32.mxu0 0.0
      %944 = vmatmul.mubr.f32.gmra.mrb[0].mxu0 %v872
      %v945 = vpop.f32.mrb[0].mxu0
      %v946 = vadd.f32 %v866, %v945
      %v947 = vpop.f32.mrb[0].mxu0
      %948 = vdwg.mxu0
      %951 = vrot.lane.b32.xlu0 %v941, 32
      %v952 = vpop.permute.xlu0 %951
      %953 = vrot.lane.b32.xlu0 %v946, 32
      %v954 = vpop.permute.xlu0 %953
      %v957 = vsel %vm856, %v854, %v952
      %v958 = vsel %vm856, %v855, %v954
      %vm959 = vcmask 318464
      %v960 = vsel %vm959, %v957, 0.0
      %v961 = vsel %vm959, %v958, 0.0
      %vm962 = vcmask 523264
      %963 = vst.msk [vmem:[%s307] sm:$0xff] %vm962, %v960
      %964 = vst.msk [vmem:[%s307 + $0x8] sm:$0xff] %vm962, %v961
      %p965 = scmp.lt.s32.totalorder %s21, 1
      %s966 = scalar_select %p965, %s21, 1
      %p967 = scmp.lt.s32.totalorder %s22, 7
      %s968 = scalar_select %p967, %s22, 7
      %s969 = smul.addr %s968, 2
      %s970 = smul.addr %s966, 16
      %s971 = sadd.s32 %s969, %s970
      %s972 = smul.addr %s971, 8
      %s973 = scalar_lea.vmem %s6, %s972
      // Predicated region
      $region49: #{t_dcrnn_rollout.1} parent=43 // pred_check
        %p974 = pneg %p187
      $region50: #{t_dcrnn_rollout.1} parent=43 // pred_check_branch
        %976 = sbr.rel (%p974) target = $region52
      $region51: #{t_dcrnn_rollout.1} parent=43 // pred_region
        _
      $region52: #{t_dcrnn_rollout.1} parent=43 // pred_fallthru
        _
    $region44: #{t_dcrnn_rollout.1} parent=5 // pred_fallthru
      _
    %p977 = scmp.le.s32.totalorder 2, %s12
    // Predicated region
    $region53: #{t_dcrnn_rollout.1} parent=5 // pred_check
      %p978 = pneg %p977
    $region54: #{t_dcrnn_rollout.1} parent=5 // pred_check_branch
      %980 = sbr.rel (%p978) target = $region56
    $region55: #{t_dcrnn_rollout.1} parent=5 // pred_region
      %s981 = ssub.s32 %s12, 2
      // Predicated region
      $region57: #{t_dcrnn_rollout.1} parent=55 // pred_check
        %p982 = pneg %p193
      $region58: #{t_dcrnn_rollout.1} parent=55 // pred_check_branch
        %984 = sbr.rel (%p982) target = $region60
      $region59: #{t_dcrnn_rollout.1} parent=55 // pred_region
        %p985 = scmp.lt.s32.totalorder %s23, 1
        %s986 = scalar_select %p985, %s23, 1
        %p987 = scmp.lt.s32.totalorder %s24, 7
        %s988 = scalar_select %p987, %s24, 7
        %s989 = smul.addr %s988, 2
        %s990 = smul.addr %s986, 16
        %s991 = sadd.s32 %s989, %s990
        %s992 = smul.addr %s991, 8
        %s993 = scalar_lea.vmem %s6, %s992
      $region60: #{t_dcrnn_rollout.1} parent=55 // pred_fallthru
        _
    $region56: #{t_dcrnn_rollout.1} parent=5 // pred_fallthru
      _
  $region6: #{t_dcrnn_rollout.1} parent=0 // loop_footer
    %s16 = sadd.s32 1, %s12
  $region7: #{t_dcrnn_rollout.1} parent=0 // loop_footer_branch
    %11 = sbr.rel target = $region3
  $region8: #{t_dcrnn_rollout.1} parent=0 // loop_exit
    _

</llo_original>
